<compile_context>
chip_gen: v7x
topology: tpu7x:2x2x1
jax: 0.10.0
libtpu: 0.0.40
codegen_flags: <defaults>
</compile_context>

<pallas_src>
import jax
import jax.numpy as jnp
import numpy as np
from jax.experimental import pallas as pl
from jax.experimental.pallas import tpu as pltpu

NEG_SLOPE = 0.01     # torch.nn.LeakyReLU default
BN_EPS = 1e-5        # torch.nn.BatchNorm2d default
HW = 81              # 9 * 9 board
NPOL = 82            # policy logits
NPAD = 128           # lane-padded output width
NEG_BIG = -1e30      # bias value for padded logit lanes (exp underflows to 0)


def _round_up(a, b):
    return (a + b - 1) // b * b


# --------- pass 1: conv1x1 + per-channel batch-stat partial sums ------------
def stats_kernel(n_ref, wc_ref, bc_ref, x_ref, stats_ref):
    # n_ref: (1,) SMEM, wc_ref: (2,C) SMEM, bc_ref: (2,) SMEM
    # x_ref: (C, tile_n, HW) VMEM tile
    # stats_ref: (4, HW) VMEM accumulator  [sum0, sumsq0, sum1, sumsq1]
    C = x_ref.shape[0]
    tile_n = x_ref.shape[1]
    i = pl.program_id(0)

    @pl.when(i == 0)
    def _():
        stats_ref[...] = jnp.zeros_like(stats_ref)

    # mask padded batch rows (x is zero-padded to a multiple of tile_n)
    rows = i * tile_n + jax.lax.broadcasted_iota(jnp.int32, (tile_n, 1), 0)
    valid = rows < n_ref[0]

    parts = []
    for k in range(2):                       # 2 conv output channels (static)
        acc = jnp.zeros((tile_n, HW), jnp.float32)
        for c in range(C):                   # 1x1 conv = channel mixing
            acc = acc + wc_ref[k, c] * x_ref[c]
        acc = acc + bc_ref[k]
        accm = jnp.where(valid, acc, 0.0)
        parts.append(jnp.sum(accm, axis=0, keepdims=True))          # (1, HW)
        parts.append(jnp.sum(accm * accm, axis=0, keepdims=True))   # (1, HW)
    stats_ref[...] += jnp.concatenate(parts, axis=0)                # (4, HW)


# --------- pass 2: folded conv+BN, LeakyReLU, fused fc, softmax --------------
def head_kernel(wc_ref, bc_ref, x_ref, w_ref, bf_ref, out_ref, flat_ref):
    # wc_ref/bc_ref: BN-folded conv params (SMEM)
    # x_ref: (C, tile_n, HW), w_ref: (256, NPAD), bf_ref: (1, NPAD)
    # out_ref: (tile_n, NPAD), flat_ref scratch: (tile_n, 256)
    C = x_ref.shape[0]
    tile_n = x_ref.shape[1]

    # keep the lane-pad regions of the fused-feature scratch zero every step
    # (scratch is per-core under "parallel" semantics; don't rely on step 0)
    flat_ref[:, HW:128] = jnp.zeros((tile_n, 128 - HW), jnp.float32)
    flat_ref[:, 128 + HW:] = jnp.zeros((tile_n, 128 - HW), jnp.float32)

    for k in range(2):
        acc = jnp.zeros((tile_n, HW), jnp.float32)
        for c in range(C):
            acc = acc + wc_ref[k, c] * x_ref[c]
        acc = acc + bc_ref[k]                              # conv + BN folded
        y = jnp.where(acc > 0, acc, NEG_SLOPE * acc)       # LeakyReLU
        flat_ref[:, k * 128:k * 128 + HW] = y              # lane-aligned slab

    # single fused (tile_n,256) x (256,128) MXU pass; padded cols get -1e30
    logits = jnp.dot(flat_ref[...], w_ref[...],
                     preferred_element_type=jnp.float32) + bf_ref[...]

    # softmax over dim=1 (padded lanes underflow to 0 and never affect the sum)
    m = jnp.max(logits, axis=-1, keepdims=True)
    e = jnp.exp(logits - m)
    denom = jnp.sum(e, axis=-1, keepdims=True)
    out_ref[...] = e * pl.reciprocal(denom, approx=True)


def policy_head(x_nchw, wc, bc, gamma, beta, w_fc, b_fc, *, tile_n=512):
    """x_nchw: (N, C, 9, 9) f32. w_fc: (82, 162) torch layout. Returns (N, 82)."""
    N, C, H, W = x_nchw.shape
    assert H * W == HW, "PolicyHead fc assumes 9x9 spatial input"

    # (C, N, 81): batch on the sublane axis, lanes = 81 spatial positions
    x = jnp.transpose(x_nchw.reshape(N, C, HW), (1, 0, 2)).astype(jnp.float32)

    tile_n = min(tile_n, _round_up(N, 8))
    n_pad = _round_up(N, tile_n)
    if n_pad != N:
        x = jnp.pad(x, ((0, 0), (0, n_pad - N), (0, 0)))
    grid = (n_pad // tile_n,)

    wc = wc.astype(jnp.float32)
    bc = bc.astype(jnp.float32)
    gamma = gamma.astype(jnp.float32)
    beta = beta.astype(jnp.float32)

    # ---- pass 1: global batch statistics of the conv output ----
    stats = pl.pallas_call(
        stats_kernel,
        out_shape=jax.ShapeDtypeStruct((4, HW), jnp.float32),
        grid=grid,
        in_specs=[
            pl.BlockSpec(memory_space=pltpu.MemorySpace.SMEM),    # n  (1,)
            pl.BlockSpec(memory_space=pltpu.MemorySpace.SMEM),    # wc (2,C)
            pl.BlockSpec(memory_space=pltpu.MemorySpace.SMEM),    # bc (2,)
            pl.BlockSpec((C, tile_n, HW), lambda i: (0, i, 0)),   # x tile
        ],
        out_specs=pl.BlockSpec((4, HW), lambda i: (0, 0)),        # accumulator
        compiler_params=pltpu.CompilerParams(
            dimension_semantics=("arbitrary",)),
    )(jnp.array([N], jnp.int32), wc, bc, x)

    # tiny finalize in XLA: mean / biased var -> fold BN affine into the conv
    cnt = jnp.float32(N * HW)
    totals = jnp.sum(stats, axis=1)                      # (4,)
    mean = jnp.stack([totals[0], totals[2]]) / cnt
    var = jnp.maximum(jnp.stack([totals[1], totals[3]]) / cnt - mean * mean, 0.0)
    s = gamma * jax.lax.rsqrt(var + BN_EPS)
    t = beta - mean * s
    wc_eff = wc * s[:, None]
    bc_eff = bc * s + t

    # fc weight: split per conv channel, place at row offsets 0 / 128 of a
    # fused (256, 128) weight; pad output cols 82..127 with zeros. Padded bias
    # cols are -1e30 so the in-kernel softmax ignores them.
    wf_t = jnp.transpose(w_fc.astype(jnp.float32))       # (162, 82)
    w_fused = jnp.zeros((256, NPAD), jnp.float32)
    w_fused = w_fused.at[:HW, :NPOL].set(wf_t[:HW])
    w_fused = w_fused.at[128:128 + HW, :NPOL].set(wf_t[HW:])
    bf = jnp.full((1, NPAD), NEG_BIG, jnp.float32)
    bf = bf.at[0, :NPOL].set(b_fc.astype(jnp.float32))

    out_pad = pl.pallas_call(
        head_kernel,
        out_shape=jax.ShapeDtypeStruct((n_pad, NPAD), jnp.float32),
        grid=grid,
        in_specs=[
            pl.BlockSpec(memory_space=pltpu.MemorySpace.SMEM),    # wc_eff
            pl.BlockSpec(memory_space=pltpu.MemorySpace.SMEM),    # bc_eff
            pl.BlockSpec((C, tile_n, HW), lambda i: (0, i, 0)),   # x tile
            pl.BlockSpec((256, NPAD), lambda i: (0, 0)),          # fused fc W
            pl.BlockSpec((1, NPAD), lambda i: (0, 0)),            # fc bias
        ],
        out_specs=pl.BlockSpec((tile_n, NPAD), lambda i: (i, 0)),  # lane-dense
        scratch_shapes=[pltpu.VMEM((tile_n, 256), jnp.float32)],
        compiler_params=pltpu.CompilerParams(
            dimension_semantics=("parallel",)),                    # v7x 2 TCs
    )(wc_eff, bc_eff, x, w_fused, bf)

    return out_pad[:N, :NPOL]


if __name__ == "__main__":
    key = jax.random.PRNGKey(0)
    N, C = 2, 4  # small: batch=2, num_channels=4, board 9x9 (fixed by the fc)
    k_x, k_wc, k_bc, k_wf, k_bf = jax.random.split(key, 5)

    x = jax.random.normal(k_x, (N, C, 9, 9), jnp.float32)

    conv_bound = float(1.0 / np.sqrt(C * 1 * 1))
    wc = jax.random.uniform(k_wc, (2, C), jnp.float32, -conv_bound, conv_bound)
    bc = jax.random.uniform(k_bc, (2,), jnp.float32, -conv_bound, conv_bound)
    gamma = jnp.ones((2,), jnp.float32)   # BatchNorm2d weight init
    beta = jnp.zeros((2,), jnp.float32)   # BatchNorm2d bias init
    fc_bound = float(1.0 / np.sqrt(2 * 9 * 9))
    w_fc = jax.random.uniform(k_wf, (82, 2 * 9 * 9), jnp.float32, -fc_bound, fc_bound)
    b_fc = jax.random.uniform(k_bf, (82,), jnp.float32, -fc_bound, fc_bound)

    out = policy_head(x, wc, bc, gamma, beta, w_fc, b_fc)
    out = jax.block_until_ready(out)

    # pure-JAX reference of the torch forward
    xr = x.reshape(N, C, HW)
    conv = jnp.einsum("kc,ncp->nkp", wc, xr) + bc[None, :, None]
    mean = conv.mean(axis=(0, 2), keepdims=True)
    var = conv.var(axis=(0, 2), keepdims=True)          # biased, train-mode BN
    y = gamma[None, :, None] * (conv - mean) / jnp.sqrt(var + BN_EPS) + beta[None, :, None]
    y = jnp.where(y > 0, y, NEG_SLOPE * y)
    ref = jax.nn.softmax(y.reshape(N, 2 * HW) @ w_fc.T + b_fc, axis=1)

    assert out.shape == (N, NPOL)
    assert bool(jnp.all(jnp.isfinite(out)))
    # approx reciprocal in the softmax -> allow ~1e-3-level drift
    assert bool(jnp.allclose(jnp.sum(out, axis=-1), 1.0, atol=2e-3))
    assert bool(jnp.allclose(out, ref, atol=2e-3))
    print("KERNEL_OK")
</pallas_src>

<mosaic_0001>
module attributes {stable_mosaic.version = 11 : i64} {
  func.func @stats_kernel(%arg0: i32, %arg1: memref<1xi32, #tpu.memory_space<smem>>, %arg2: memref<2x4xf32, #tpu.memory_space<smem>>, %arg3: memref<2xf32, #tpu.memory_space<smem>>, %arg4: memref<4x8x81xf32, #tpu.memory_space<vmem>>, %arg5: memref<4x81xf32, #tpu.memory_space<vmem>>) attributes {dimension_semantics = [#tpu.dimension_semantics<arbitrary>], iteration_bounds = array<i64: 1>, scalar_prefetch = 0 : i64, scratch_operands = 0 : i64, tpu.core_type = #tpu.core_type<tc>, window_params = [{transform_indices = @transform_0, window_bounds = array<i64: 1>}, {transform_indices = @transform_1, window_bounds = array<i64: 2, 4>}, {transform_indices = @transform_2, window_bounds = array<i64: 2>}, {transform_indices = @transform_3, window_bounds = array<i64: 4, 8, 81>}, {pipeline_mode = #tpu.pipeline_mode<synchronous>, transform_indices = @transform_4, window_bounds = array<i64: 4, 81>}]} {
    %c0_i32 = arith.constant 0 : i32
    %0 = arith.cmpi eq, %arg0, %c0_i32 : i32
    %1 = arith.extui %0 : i1 to i32
    %c0_i32_0 = arith.constant 0 : i32
    %2 = arith.cmpi ne, %1, %c0_i32_0 : i32
    scf.if %2 {
      %cst_51 = arith.constant 0.000000e+00 : f32
      %88 = vector.broadcast %cst_51 : f32 to vector<4x81xf32>
      %c0_52 = arith.constant 0 : index
      %c0_53 = arith.constant 0 : index
      %89 = vector.load %arg5[%c0_52, %c0_53] : memref<4x81xf32, #tpu.memory_space<vmem>>, vector<4x81xf32>
      tpu.vector_store %arg5[%c0_52, %c0_53], %88 {strides = array<i32>} : memref<4x81xf32, #tpu.memory_space<vmem>>, vector<4x81xf32>,
    } else {
    }
    %c8_i32 = arith.constant 8 : i32
    %3 = arith.muli %arg0, %c8_i32 : i32
    %4 = tpu.iota {dimensions = array<i32: 0>} : vector<8x1xi32>
    %5 = vector.broadcast %3 : i32 to vector<8x1xi32>
    %6 = arith.addi %5, %4 : vector<8x1xi32>
    %c0 = arith.constant 0 : index
    %7 = memref.load %arg1[%c0] : memref<1xi32, #tpu.memory_space<smem>>
    %8 = vector.broadcast %7 : i32 to vector<8x1xi32>
    %9 = arith.cmpi slt, %6, %8 : vector<8x1xi32>
    %cst = arith.constant 0.000000e+00 : f32
    %10 = vector.broadcast %cst : f32 to vector<8x81xf32>
    %c0_1 = arith.constant 0 : index
    %c0_2 = arith.constant 0 : index
    %11 = memref.load %arg2[%c0_1, %c0_2] : memref<2x4xf32, #tpu.memory_space<smem>>
    %c0_3 = arith.constant 0 : index
    %c0_4 = arith.constant 0 : index
    %c0_5 = arith.constant 0 : index
    %12 = vector.load %arg4[%c0_3, %c0_4, %c0_5] : memref<4x8x81xf32, #tpu.memory_space<vmem>>, vector<1x8x81xf32>
    %13 = vector.shape_cast %12 : vector<1x8x81xf32> to vector<8x81xf32>
    %14 = vector.broadcast %11 : f32 to vector<8x81xf32>
    %15 = arith.mulf %14, %13 : vector<8x81xf32>
    %16 = arith.addf %10, %15 : vector<8x81xf32>
    %c0_6 = arith.constant 0 : index
    %c1 = arith.constant 1 : index
    %17 = memref.load %arg2[%c0_6, %c1] : memref<2x4xf32, #tpu.memory_space<smem>>
    %c1_7 = arith.constant 1 : index
    %c0_8 = arith.constant 0 : index
    %c0_9 = arith.constant 0 : index
    %18 = vector.load %arg4[%c1_7, %c0_8, %c0_9] : memref<4x8x81xf32, #tpu.memory_space<vmem>>, vector<1x8x81xf32>
    %19 = vector.shape_cast %18 : vector<1x8x81xf32> to vector<8x81xf32>
    %20 = vector.broadcast %17 : f32 to vector<8x81xf32>
    %21 = arith.mulf %20, %19 : vector<8x81xf32>
    %22 = arith.addf %16, %21 : vector<8x81xf32>
    %c0_10 = arith.constant 0 : index
    %c2 = arith.constant 2 : index
    %23 = memref.load %arg2[%c0_10, %c2] : memref<2x4xf32, #tpu.memory_space<smem>>
    %c2_11 = arith.constant 2 : index
    %c0_12 = arith.constant 0 : index
    %c0_13 = arith.constant 0 : index
    %24 = vector.load %arg4[%c2_11, %c0_12, %c0_13] : memref<4x8x81xf32, #tpu.memory_space<vmem>>, vector<1x8x81xf32>
    %25 = vector.shape_cast %24 : vector<1x8x81xf32> to vector<8x81xf32>
    %26 = vector.broadcast %23 : f32 to vector<8x81xf32>
    %27 = arith.mulf %26, %25 : vector<8x81xf32>
    %28 = arith.addf %22, %27 : vector<8x81xf32>
    %c0_14 = arith.constant 0 : index
    %c3 = arith.constant 3 : index
    %29 = memref.load %arg2[%c0_14, %c3] : memref<2x4xf32, #tpu.memory_space<smem>>
    %c3_15 = arith.constant 3 : index
    %c0_16 = arith.constant 0 : index
    %c0_17 = arith.constant 0 : index
    %30 = vector.load %arg4[%c3_15, %c0_16, %c0_17] : memref<4x8x81xf32, #tpu.memory_space<vmem>>, vector<1x8x81xf32>
    %31 = vector.shape_cast %30 : vector<1x8x81xf32> to vector<8x81xf32>
    %32 = vector.broadcast %29 : f32 to vector<8x81xf32>
    %33 = arith.mulf %32, %31 : vector<8x81xf32>
    %34 = arith.addf %28, %33 : vector<8x81xf32>
    %c0_18 = arith.constant 0 : index
    %35 = memref.load %arg3[%c0_18] : memref<2xf32, #tpu.memory_space<smem>>
    %36 = vector.broadcast %35 : f32 to vector<8x81xf32>
    %37 = arith.addf %34, %36 : vector<8x81xf32>
    %cst_19 = arith.constant 0.000000e+00 : f32
    %38 = vector.shape_cast %9 : vector<8x1xi1> to vector<8x1xi1>
    %39 = vector.broadcast %38 : vector<8x1xi1> to vector<8x81xi1>
    %40 = vector.broadcast %cst_19 : f32 to vector<8x81xf32>
    %41 = arith.select %39, %37, %40 : vector<8x81xi1>, vector<8x81xf32>
    %cst_20 = arith.constant dense<0.000000e+00> : vector<81xf32>
    %42 = vector.multi_reduction <add>, %41, %cst_20 [0] : vector<8x81xf32> to vector<81xf32>
    %43 = vector.shape_cast %42 : vector<81xf32> to vector<1x81xf32>
    %44 = arith.mulf %41, %41 : vector<8x81xf32>
    %cst_21 = arith.constant dense<0.000000e+00> : vector<81xf32>
    %45 = vector.multi_reduction <add>, %44, %cst_21 [0] : vector<8x81xf32> to vector<81xf32>
    %46 = vector.shape_cast %45 : vector<81xf32> to vector<1x81xf32>
    %cst_22 = arith.constant 0.000000e+00 : f32
    %47 = vector.broadcast %cst_22 : f32 to vector<8x81xf32>
    %c1_23 = arith.constant 1 : index
    %c0_24 = arith.constant 0 : index
    %48 = memref.load %arg2[%c1_23, %c0_24] : memref<2x4xf32, #tpu.memory_space<smem>>
    %c0_25 = arith.constant 0 : index
    %c0_26 = arith.constant 0 : index
    %c0_27 = arith.constant 0 : index
    %49 = vector.load %arg4[%c0_25, %c0_26, %c0_27] : memref<4x8x81xf32, #tpu.memory_space<vmem>>, vector<1x8x81xf32>
    %50 = vector.shape_cast %49 : vector<1x8x81xf32> to vector<8x81xf32>
    %51 = vector.broadcast %48 : f32 to vector<8x81xf32>
    %52 = arith.mulf %51, %50 : vector<8x81xf32>
    %53 = arith.addf %47, %52 : vector<8x81xf32>
    %c1_28 = arith.constant 1 : index
    %c1_29 = arith.constant 1 : index
    %54 = memref.load %arg2[%c1_28, %c1_29] : memref<2x4xf32, #tpu.memory_space<smem>>
    %c1_30 = arith.constant 1 : index
    %c0_31 = arith.constant 0 : index
    %c0_32 = arith.constant 0 : index
    %55 = vector.load %arg4[%c1_30, %c0_31, %c0_32] : memref<4x8x81xf32, #tpu.memory_space<vmem>>, vector<1x8x81xf32>
    %56 = vector.shape_cast %55 : vector<1x8x81xf32> to vector<8x81xf32>
    %57 = vector.broadcast %54 : f32 to vector<8x81xf32>
    %58 = arith.mulf %57, %56 : vector<8x81xf32>
    %59 = arith.addf %53, %58 : vector<8x81xf32>
    %c1_33 = arith.constant 1 : index
    %c2_34 = arith.constant 2 : index
    %60 = memref.load %arg2[%c1_33, %c2_34] : memref<2x4xf32, #tpu.memory_space<smem>>
    %c2_35 = arith.constant 2 : index
    %c0_36 = arith.constant 0 : index
    %c0_37 = arith.constant 0 : index
    %61 = vector.load %arg4[%c2_35, %c0_36, %c0_37] : memref<4x8x81xf32, #tpu.memory_space<vmem>>, vector<1x8x81xf32>
    %62 = vector.shape_cast %61 : vector<1x8x81xf32> to vector<8x81xf32>
    %63 = vector.broadcast %60 : f32 to vector<8x81xf32>
    %64 = arith.mulf %63, %62 : vector<8x81xf32>
    %65 = arith.addf %59, %64 : vector<8x81xf32>
    %c1_38 = arith.constant 1 : index
    %c3_39 = arith.constant 3 : index
    %66 = memref.load %arg2[%c1_38, %c3_39] : memref<2x4xf32, #tpu.memory_space<smem>>
    %c3_40 = arith.constant 3 : index
    %c0_41 = arith.constant 0 : index
    %c0_42 = arith.constant 0 : index
    %67 = vector.load %arg4[%c3_40, %c0_41, %c0_42] : memref<4x8x81xf32, #tpu.memory_space<vmem>>, vector<1x8x81xf32>
    %68 = vector.shape_cast %67 : vector<1x8x81xf32> to vector<8x81xf32>
    %69 = vector.broadcast %66 : f32 to vector<8x81xf32>
    %70 = arith.mulf %69, %68 : vector<8x81xf32>
    %71 = arith.addf %65, %70 : vector<8x81xf32>
    %c1_43 = arith.constant 1 : index
    %72 = memref.load %arg3[%c1_43] : memref<2xf32, #tpu.memory_space<smem>>
    %73 = vector.broadcast %72 : f32 to vector<8x81xf32>
    %74 = arith.addf %71, %73 : vector<8x81xf32>
    %cst_44 = arith.constant 0.000000e+00 : f32
    %75 = vector.shape_cast %9 : vector<8x1xi1> to vector<8x1xi1>
    %76 = vector.broadcast %75 : vector<8x1xi1> to vector<8x81xi1>
    %77 = vector.broadcast %cst_44 : f32 to vector<8x81xf32>
    %78 = arith.select %76, %74, %77 : vector<8x81xi1>, vector<8x81xf32>
    %cst_45 = arith.constant dense<0.000000e+00> : vector<81xf32>
    %79 = vector.multi_reduction <add>, %78, %cst_45 [0] : vector<8x81xf32> to vector<81xf32>
    %80 = vector.shape_cast %79 : vector<81xf32> to vector<1x81xf32>
    %81 = arith.mulf %78, %78 : vector<8x81xf32>
    %cst_46 = arith.constant dense<0.000000e+00> : vector<81xf32>
    %82 = vector.multi_reduction <add>, %81, %cst_46 [0] : vector<8x81xf32> to vector<81xf32>
    %83 = vector.shape_cast %82 : vector<81xf32> to vector<1x81xf32>
    %c0_47 = arith.constant 0 : index
    %c0_48 = arith.constant 0 : index
    %84 = vector.load %arg5[%c0_47, %c0_48] : memref<4x81xf32, #tpu.memory_space<vmem>>, vector<4x81xf32>
    %85 = tpu.concatenate %43, %46, %80, %83 in 0 : vector<1x81xf32>, vector<1x81xf32>, vector<1x81xf32>, vector<1x81xf32> -> vector<4x81xf32>
    %86 = arith.addf %84, %85 : vector<4x81xf32>
    %c0_49 = arith.constant 0 : index
    %c0_50 = arith.constant 0 : index
    %87 = vector.load %arg5[%c0_49, %c0_50] : memref<4x81xf32, #tpu.memory_space<vmem>>, vector<4x81xf32>
    tpu.vector_store %arg5[%c0_49, %c0_50], %86 {strides = array<i32>} : memref<4x81xf32, #tpu.memory_space<vmem>>, vector<4x81xf32>,
    return
  }
  func.func @transform_0(%arg0: i32) -> i32 {
    %c0_i32 = arith.constant 0 : i32
    %c0_i32_0 = arith.constant 0 : i32
    return %c0_i32 : i32
  }
  func.func @transform_1(%arg0: i32) -> (i32, i32) {
    %c0_i32 = arith.constant 0 : i32
    %c0_i32_0 = arith.constant 0 : i32
    %c0_i32_1 = arith.constant 0 : i32
    return %c0_i32, %c0_i32_0 : i32, i32
  }
  func.func @transform_2(%arg0: i32) -> i32 {
    %c0_i32 = arith.constant 0 : i32
    %c0_i32_0 = arith.constant 0 : i32
    return %c0_i32 : i32
  }
  func.func @transform_3(%arg0: i32) -> (i32, i32, i32) {
    %c0_i32 = arith.constant 0 : i32
    %c0_i32_0 = arith.constant 0 : i32
    %c0_i32_1 = arith.constant 0 : i32
    return %c0_i32, %arg0, %c0_i32_0 : i32, i32, i32
  }
  func.func @transform_4(%arg0: i32) -> (i32, i32) {
    %c0_i32 = arith.constant 0 : i32
    %c0_i32_0 = arith.constant 0 : i32
    %c0_i32_1 = arith.constant 0 : i32
    return %c0_i32, %c0_i32_0 : i32, i32
  }
}

</mosaic_0001>

<llo_original>
// kernel: tpu_custom_call.1
$region0: #{tpu_custom_call.1}
  #allocation0 [shape = 'u32[]', space=smem, size = 0x4, offset = 0x4, fixed_abs, tag = 'smem constant byte address 0x4 - core index']
  #allocation1 [shape = 'u32[144,128]{1,0:T(1,128)}', space=vmem, size = 0x12000, scoped, tag = 'internal scratch']
  #allocation2 [shape = 's32[1]{0:T(128)S(6)}', space=smem, size = 0x200, scoped, tag = 'scoped memory for tpu_custom_call.1']
  %s0 = inlined_call_operand.<no memory space> [shape: s32[1], index: 0, kind: input, shape index: {}]
  %s1 = inlined_call_operand.vmem [shape: f32[2,4], index: 1, kind: input, shape index: {}]
  %s2 = inlined_call_operand.vmem [shape: f32[2], index: 2, kind: input, shape index: {}]
  %s3 = inlined_call_operand.hbm [shape: f32[4,8,81], index: 3, kind: input, shape index: {}]
  %s4 = inlined_call_operand.hbm [shape: f32[4,81], index: 4, kind: output, shape index: {}]
  %s5 = sld [smem:[#allocation0]]
  $region42: #{tpu_custom_call.1} parent=0
    _
  %s7 = ssub.s32 1, %s5
  %s8 = scalar_select 0, %s7, %s5
  %9 = sst [smem:[#allocation2]] %s0
  $region1: #{tpu_custom_call.1} parent=0
    #allocation3 [shape = 'u8[1024]{0}', space=smem, size = 0x400, scoped, tag = 'input window, operand 1, single buffered']
    #allocation4 [shape = 's32[1]{0}', space=sflag, size = 0x4, scoped, tag = 'scoped memory for tpu_custom_call.1']
    #allocation5 [shape = 's32[1]{0}', space=sflag, size = 0x4, scoped, tag = 'scoped memory for tpu_custom_call.1']
    #allocation6 [shape = 's32[1]{0}', space=sflag, size = 0x4, scoped, tag = 'scoped memory for tpu_custom_call.1']
    #allocation7 [shape = 'u8[512]{0}', space=smem, size = 0x200, scoped, tag = 'input window, operand 2, single buffered']
    #allocation8 [shape = 's32[1]{0}', space=sflag, size = 0x4, scoped, tag = 'scoped memory for tpu_custom_call.1']
    #allocation9 [shape = 'u8[16384]{0}', space=vmem, size = 0x4000, scoped, tag = 'input window, operand 3, single buffered']
    #allocation10 [shape = 'u8[2048]{0}', space=vmem, size = 0x800, scoped, tag = 'output window, operand 0, single buffered']
    %10 = vsyncpa [#allocation6], 0
    %11 = vsyncpa [#allocation8], 0
    %12 = vsyncpa [#allocation4], 0
    %13 = vsyncpa [#allocation5], 0
    // Predicated region
    $region2: #{tpu_custom_call.1} parent=1 // pred_check
      _
    $region3: #{tpu_custom_call.1} parent=1 // pred_check_branch
      %15 = sbr.rel (0) target = $region5
    $region4: #{tpu_custom_call.1} parent=1 // pred_region
      _
    $region5: #{tpu_custom_call.1} parent=1 // pred_fallthru
      _
    // Predicated region
    $region6: #{tpu_custom_call.1} parent=1 // pred_check
      _
    $region7: #{tpu_custom_call.1} parent=1 // pred_check_branch
      %17 = sbr.rel (0) target = $region9
    $region8: #{tpu_custom_call.1} parent=1 // pred_region
      %s19 = ssub.s32 32, 32
      %20 = vsyncadd [#allocation6], %s19
      %s22 = sshll.u32 %s1, 4
      %s23 = int_to_ptr.vmem [resolvable:$true] %s22
      %25 = dma.vmem_to_smem %s23, 32, [#allocation3], [#allocation6]
    $region9: #{tpu_custom_call.1} parent=1 // pred_fallthru
      _
    // Predicated region
    $region10: #{tpu_custom_call.1} parent=1 // pred_check
      _
    $region11: #{tpu_custom_call.1} parent=1 // pred_check_branch
      %27 = sbr.rel (0) target = $region13
    $region12: #{tpu_custom_call.1} parent=1 // pred_region
      %s29 = ssub.s32 16, 16
      %30 = vsyncadd [#allocation8], %s29
      %s32 = sshll.u32 %s2, 4
      %s33 = int_to_ptr.vmem [resolvable:$true] %s32
      %35 = dma.vmem_to_smem %s33, 16, [#allocation7], [#allocation8]
    $region13: #{tpu_custom_call.1} parent=1 // pred_fallthru
      _
    // Predicated region
    $region14: #{tpu_custom_call.1} parent=1 // pred_check
      _
    $region15: #{tpu_custom_call.1} parent=1 // pred_check_branch
      %37 = sbr.rel (0) target = $region17
    $region16: #{tpu_custom_call.1} parent=1 // pred_region
      %s39 = ssub.s32 512, 512
      %40 = vsyncadd [#allocation4], %s39
      %s41 = sshll.u32 [#allocation9], 4
      %s42 = int_to_ptr.vmem [resolvable:$true] %s41
      %47 = dma.hbm_to_vmem [thread:$0]  %s3, 512, %s42, [#allocation4], 128, 128, 8
    $region17: #{tpu_custom_call.1} parent=1 // pred_fallthru
      _
    // Predicated region
    $region18: #{tpu_custom_call.1} parent=1 // pred_check
      _
    $region19: #{tpu_custom_call.1} parent=1 // pred_check_branch
      %49 = sbr.rel (0) target = $region21
    $region20: #{tpu_custom_call.1} parent=1 // pred_region
      %50 = dma.done [#allocation6], 32
    $region21: #{tpu_custom_call.1} parent=1 // pred_fallthru
      _
    // Predicated region
    $region22: #{tpu_custom_call.1} parent=1 // pred_check
      _
    $region23: #{tpu_custom_call.1} parent=1 // pred_check_branch
      %52 = sbr.rel (0) target = $region25
    $region24: #{tpu_custom_call.1} parent=1 // pred_region
      %53 = dma.done [#allocation8], 16
    $region25: #{tpu_custom_call.1} parent=1 // pred_fallthru
      _
    // Predicated region
    $region26: #{tpu_custom_call.1} parent=1 // pred_check
      _
    $region27: #{tpu_custom_call.1} parent=1 // pred_check_branch
      %55 = sbr.rel (0) target = $region29
    $region28: #{tpu_custom_call.1} parent=1 // pred_region
      %56 = dma.done [#allocation4], 512
    $region29: #{tpu_custom_call.1} parent=1 // pred_fallthru
      _
    %57 = sfence
    %p58 = scmp.eq.s32.totalorder 0, 0
    // Predicated region
    $region30: #{tpu_custom_call.1} parent=1 // pred_check
      %p59 = pneg %p58
    $region31: #{tpu_custom_call.1} parent=1 // pred_check_branch
      %61 = sbr.rel (%p59) target = $region33
    $region32: #{tpu_custom_call.1} parent=1 // pred_region
      %vm62 = vcmask 658432
      %63 = vst.msk [vmem:[#allocation10] sm:$0xf] %vm62, 0.0
    $region33: #{tpu_custom_call.1} parent=1 // pred_fallthru
      _
    %s64 = smul.u32 0, 8
    %v65 = vlaneseq
    %v66 = vshrl.u32 %v65, 7
    %v67 = vstv %s64
    %v68 = vadd.s32 %v67, %v66
    %s69 = sld [smem:[#allocation2]]
    %v70 = vstv %s69
    %vm71 = vcmp.lt.s32.totalorder %v68, %v70
    %s72 = sld [smem:[#allocation3]]
    %v73 = vld [vmem:[#allocation9] sm:$0xff]
    %v74 = vstv %s72
    %v75 = vmul.f32 %v74, %v73
    %v76 = vadd.f32 %v75, 0.0
    %s77 = sld [smem:[#allocation3 + $0x1]]
    %s78 = scalar_lea.vmem [#allocation9], 8
    %v79 = vld [vmem:[%s78] sm:$0xff]
    %v80 = vstv %s77
    %v81 = vmul.f32 %v80, %v79
    %v82 = vadd.f32 %v76, %v81
    %s83 = sld [smem:[#allocation3 + $0x2]]
    %s84 = scalar_lea.vmem [#allocation9], 16
    %v85 = vld [vmem:[%s84] sm:$0xff]
    %v86 = vstv %s83
    %v87 = vmul.f32 %v86, %v85
    %v88 = vadd.f32 %v82, %v87
    %s89 = sld [smem:[#allocation3 + $0x3]]
    %s90 = scalar_lea.vmem [#allocation9], 24
    %v91 = vld [vmem:[%s90] sm:$0xff]
    %v92 = vstv %s89
    %v93 = vmul.f32 %v92, %v91
    %v94 = vadd.f32 %v88, %v93
    %s95 = sld [smem:[#allocation7]]
    %v96 = vstv %s95
    %v97 = vadd.f32 %v94, %v96
    %v98 = vsel %vm71, 1, 0
    %vm99 = vcmp.eq.s32.totalorder %v98, 1
    %v100 = vsel %vm99, %v97, 0.0
    %vm101 = vcmask 662528
    %v102 = vsel %vm101, %v100, 0.0
    %v103 = vrot.slane %v102, 4
    %v104 = vadd.f32 %v102, %v103
    %v105 = vrot.slane %v104, 2
    %v106 = vadd.f32 %v104, %v105
    %v107 = vrot.slane %v106, 1
    %v108 = vadd.f32 %v106, %v107
    %v109 = vmul.f32 %v100, %v100
    %v110 = vsel %vm101, %v109, 0.0
    %v111 = vrot.slane %v110, 4
    %v112 = vadd.f32 %v110, %v111
    %v113 = vrot.slane %v112, 2
    %v114 = vadd.f32 %v112, %v113
    %v115 = vrot.slane %v114, 1
    %v116 = vadd.f32 %v114, %v115
    %s117 = sld [smem:[#allocation3 + $0x80]]
    %v118 = vstv %s117
    %v119 = vmul.f32 %v118, %v73
    %v120 = vadd.f32 %v119, 0.0
    %s121 = sld [smem:[#allocation3 + $0x81]]
    %v122 = vstv %s121
    %v123 = vmul.f32 %v122, %v79
    %v124 = vadd.f32 %v120, %v123
    %s125 = sld [smem:[#allocation3 + $0x82]]
    %v126 = vstv %s125
    %v127 = vmul.f32 %v126, %v85
    %v128 = vadd.f32 %v124, %v127
    %s129 = sld [smem:[#allocation3 + $0x83]]
    %v130 = vstv %s129
    %v131 = vmul.f32 %v130, %v91
    %v132 = vadd.f32 %v128, %v131
    %s133 = sld [smem:[#allocation7 + $0x1]]
    %v134 = vstv %s133
    %v135 = vadd.f32 %v132, %v134
    %v136 = vsel %vm99, %v135, 0.0
    %v137 = vsel %vm101, %v136, 0.0
    %v138 = vrot.slane %v137, 4
    %v139 = vadd.f32 %v137, %v138
    %v140 = vrot.slane %v139, 2
    %v141 = vadd.f32 %v139, %v140
    %v142 = vrot.slane %v141, 1
    %v143 = vadd.f32 %v141, %v142
    %v144 = vmul.f32 %v136, %v136
    %v145 = vsel %vm101, %v144, 0.0
    %v146 = vrot.slane %v145, 4
    %v147 = vadd.f32 %v145, %v146
    %v148 = vrot.slane %v147, 2
    %v149 = vadd.f32 %v147, %v148
    %v150 = vrot.slane %v149, 1
    %v151 = vadd.f32 %v149, %v150
    %v152 = vld [vmem:[#allocation10] sm:$0xf]
    %vm153 = vcmask 1040384
    %v154 = vsel %vm153, %v108, %v116
    %vm155 = vcmask 1041408
    %v156 = vsel %vm155, %v154, %v143
    %vm157 = vcmask 1042432
    %v158 = vsel %vm157, %v156, %v151
    %v159 = vadd.f32 %v152, %v158
    %vm160 = vcmask 658432
    %161 = vst.msk [vmem:[#allocation10] sm:$0xf] %vm160, %v159
    // Predicated region
    $region34: #{tpu_custom_call.1} parent=1 // pred_check
      _
    $region35: #{tpu_custom_call.1} parent=1 // pred_check_branch
      %163 = sbr.rel (0) target = $region37
    $region36: #{tpu_custom_call.1} parent=1 // pred_region
      %s165 = ssub.s32 64, 64
      %166 = vsyncadd [#allocation5], %s165
      %s168 = sshll.u32 [#allocation10], 4
      %s169 = int_to_ptr.vmem [resolvable:$true] %s168
      %171 = dma.vmem_to_hbm [thread:$0]  %s169, 64, %s4, [#allocation5]
    $region37: #{tpu_custom_call.1} parent=1 // pred_fallthru
      _
    // Predicated region
    $region38: #{tpu_custom_call.1} parent=1 // pred_check
      _
    $region39: #{tpu_custom_call.1} parent=1 // pred_check_branch
      %173 = sbr.rel (0) target = $region41
    $region40: #{tpu_custom_call.1} parent=1 // pred_region
      %174 = dma.done [#allocation5], 64
    $region41: #{tpu_custom_call.1} parent=1 // pred_fallthru
      _
    %175 = vsyncpa [#allocation4], 1
    %176 = vsyncpa [#allocation5], 1
    %177 = vsyncpa [#allocation6], 1
    %178 = vsyncpa [#allocation8], 1

</llo_original>
